<compile_context>
chip_gen: v7x
topology: tpu7x:2x2x1
jax: 0.10.0
libtpu: 0.0.40
codegen_flags: <defaults>
</compile_context>

<pallas_src>
import jax
import jax.numpy as jnp
from jax.experimental import pallas as pl
from jax.experimental.pallas import tpu as pltpu

_TILE = 1024  # f32 tile: 4 MiB/block, x2 double buffer = 8 MiB of live VMEM.


def _fill_kernel(dummy_ref, zeros_ref, ones_ref):
    # Scalar-only multiply in SMEM preserves 0 * NaN/Inf semantics of the
    # reference without a full-tile VPU pass; the tile write lowers to plain
    # unmasked vector stores (pure HBM-write bandwidth).
    z = dummy_ref[0] * jnp.float32(0.0)
    zeros_ref[...] = jnp.full(zeros_ref.shape, z, dtype=zeros_ref.dtype)
    # Written unconditionally so every write-back of this (tiny) block carries
    # valid data, even when the block is revisited across the i axis or the
    # grid is sharded across TensorCores.
    ones_ref[...] = jnp.ones_like(ones_ref)


def _pick_tile(n, pref=_TILE):
    # Full-array block for small n (block == full dim sidesteps the (8,128)
    # divisibility requirement); otherwise a 1024-tile: divisible by (8,128)
    # and VMEM-safe on v5e/v6e/v7x scoped defaults with double buffering.
    return n if n <= pref else pref


def baseline_forward(nodes, b, c, dummy):
    """Pallas equivalent of Baseline.forward.

    Args:
      nodes: (n_nodes, feat) array; only its leading dim is used.
      b, c:  unused (kept for signature parity with the PyTorch module).
      dummy: (1,) float parameter (initialized to ones, like nn.Parameter).

    Returns:
      (zeros(n_nodes, n_nodes) * dummy, ones(n_nodes))
    """
    del b, c  # unused, exactly as in the reference forward
    n_nodes = nodes.shape[0]
    out_dtype = jnp.promote_types(jnp.float32, dummy.dtype)

    if n_nodes == 0:  # degenerate edge case; avoid a zero-sized pallas_call
        return jnp.zeros((0, 0), out_dtype), jnp.ones((0,), jnp.float32)

    tm = _pick_tile(n_nodes)
    tn = _pick_tile(n_nodes)
    grid = (pl.cdiv(n_nodes, tm), pl.cdiv(n_nodes, tn))

    zeros_out, ones_2d = pl.pallas_call(
        _fill_kernel,
        out_shape=(
            jax.ShapeDtypeStruct((n_nodes, n_nodes), out_dtype),
            jax.ShapeDtypeStruct((1, n_nodes), jnp.float32),
        ),
        grid=grid,
        in_specs=[
            # scalar parameter lives in SMEM, passed whole (untiled)
            pl.BlockSpec(memory_space=pltpu.SMEM),
        ],
        out_specs=(
            pl.BlockSpec((tm, tn), lambda i, j: (i, j)),
            pl.BlockSpec((1, tn), lambda i, j: (0, j)),
        ),
        compiler_params=pltpu.CompilerParams(
            dimension_semantics=("parallel", "parallel")
        ),
        cost_estimate=pl.CostEstimate(
            flops=0,
            transcendentals=0,
            bytes_accessed=4 * n_nodes * n_nodes + 4 * n_nodes,
        ),
    )(dummy)

    ones_out = ones_2d.reshape((n_nodes,))

    # TODO(synk): autodiff through `dummy` (grad of zeros*dummy) is not carried
    # by the Pallas custom call; add a custom_vjp if training parity is needed.
    return zeros_out, ones_out


if __name__ == "__main__":
    key = jax.random.PRNGKey(0)
    k_nodes, k_b, k_c = jax.random.split(key, 3)

    # Small shapes consistent with the module's forward signature.
    n_nodes, hidden = 8, 32
    nodes = jax.random.normal(k_nodes, (n_nodes, hidden), dtype=jnp.float32)
    b = jax.random.normal(k_b, (n_nodes, hidden), dtype=jnp.float32)
    c = jax.random.normal(k_c, (n_nodes, hidden), dtype=jnp.float32)

    # Deterministic parameter init: nn.Parameter(torch.ones(1))
    dummy = jnp.ones((1,), dtype=jnp.float32)

    out_a, out_b = baseline_forward(nodes, b, c, dummy)
    jax.block_until_ready((out_a, out_b))

    assert out_a.shape == (n_nodes, n_nodes) and out_a.dtype == jnp.float32
    assert out_b.shape == (n_nodes,) and out_b.dtype == jnp.float32
    assert bool(jnp.all(out_a == 0.0))
    assert bool(jnp.all(out_b == 1.0))

    # Also exercise the tiled (grid > 1x1) path once, at a still-modest size.
    n_big = 2048
    nodes_big = jax.random.normal(k_nodes, (n_big, hidden), dtype=jnp.float32)
    big_a, big_b = baseline_forward(nodes_big, b, c, dummy)
    jax.block_until_ready((big_a, big_b))
    assert big_a.shape == (n_big, n_big) and bool(jnp.all(big_a == 0.0))
    assert big_b.shape == (n_big,) and bool(jnp.all(big_b == 1.0))

    print("KERNEL_OK")
</pallas_src>

<mosaic_0001>
module attributes {stable_mosaic.version = 11 : i64} {
  func.func @_fill_kernel(%arg0: i32, %arg1: i32, %arg2: memref<1xf32, #tpu.memory_space<smem>>, %arg3: memref<8x8xf32, #tpu.memory_space<vmem>>, %arg4: memref<1x8xf32, #tpu.memory_space<vmem>>) attributes {dimension_semantics = [#tpu.dimension_semantics<parallel>, #tpu.dimension_semantics<parallel>], iteration_bounds = array<i64: 1, 1>, scalar_prefetch = 0 : i64, scratch_operands = 0 : i64, tpu.core_type = #tpu.core_type<tc>, window_params = [{transform_indices = @transform_0, window_bounds = array<i64: 1>}, {transform_indices = @transform_1, window_bounds = array<i64: 8, 8>}, {transform_indices = @transform_2, window_bounds = array<i64: 1, 8>}]} {
    %c0 = arith.constant 0 : index
    %0 = memref.load %arg2[%c0] : memref<1xf32, #tpu.memory_space<smem>>
    %cst = arith.constant 0.000000e+00 : f32
    %1 = arith.mulf %0, %cst : f32
    %2 = vector.broadcast %1 : f32 to vector<8x8xf32>
    %c0_0 = arith.constant 0 : index
    %c0_1 = arith.constant 0 : index
    %3 = vector.load %arg3[%c0_0, %c0_1] : memref<8x8xf32, #tpu.memory_space<vmem>>, vector<8x8xf32>
    tpu.vector_store %arg3[%c0_0, %c0_1], %2 {strides = array<i32>} : memref<8x8xf32, #tpu.memory_space<vmem>>, vector<8x8xf32>,
    %cst_2 = arith.constant 1.000000e+00 : f32
    %4 = vector.broadcast %cst_2 : f32 to vector<1x8xf32>
    %c0_3 = arith.constant 0 : index
    %c0_4 = arith.constant 0 : index
    %5 = vector.load %arg4[%c0_3, %c0_4] : memref<1x8xf32, #tpu.memory_space<vmem>>, vector<1x8xf32>
    tpu.vector_store %arg4[%c0_3, %c0_4], %4 {strides = array<i32>} : memref<1x8xf32, #tpu.memory_space<vmem>>, vector<1x8xf32>,
    return
  }
  func.func @transform_0(%arg0: i32, %arg1: i32) -> i32 {
    %c0_i32 = arith.constant 0 : i32
    %c0_i32_0 = arith.constant 0 : i32
    return %c0_i32 : i32
  }
  func.func @transform_1(%arg0: i32, %arg1: i32) -> (i32, i32) {
    %c0_i32 = arith.constant 0 : i32
    return %arg0, %arg1 : i32, i32
  }
  func.func @transform_2(%arg0: i32, %arg1: i32) -> (i32, i32) {
    %c0_i32 = arith.constant 0 : i32
    %c0_i32_0 = arith.constant 0 : i32
    return %c0_i32, %arg1 : i32, i32
  }
}

</mosaic_0001>

<llo_original>
// kernel: tpu_custom_call.1
$region0: #{tpu_custom_call.1}
  #allocation0 [shape = 'u32[]', space=smem, size = 0x4, offset = 0x4, fixed_abs, tag = 'smem constant byte address 0x4 - core index']
  #allocation1 [shape = 'u32[144,128]{1,0:T(1,128)}', space=vmem, size = 0x12000, scoped, tag = 'internal scratch']
  #allocation2 [shape = 'f32[1]{0:T(128)S(6)}', space=smem, size = 0x200, scoped, tag = 'scoped memory for tpu_custom_call.1']
  %s0 = inlined_call_operand.<no memory space> [shape: f32[1], index: 0, kind: input, shape index: {}]
  %s1 = inlined_call_operand.hbm [shape: f32[8,8], index: 1, kind: output, shape index: {0}]
  %s2 = inlined_call_operand.hbm [shape: f32[1,8], index: 2, kind: output, shape index: {1}]
  %3 = xla_tuple %s1, %s2
  %s4 = sld [smem:[#allocation0]]
  $region22: #{tpu_custom_call.1} parent=0
    _
  %s6 = ssub.s32 1, %s4
  %s7 = scalar_select 0, %s6, %s4
  %8 = sst [smem:[#allocation2]] %s0
  $region1: #{tpu_custom_call.1} parent=0
    #allocation3 [shape = 'u8[4096]{0}', space=vmem, size = 0x1000, scoped, tag = 'output window, operand 0, single buffered']
    #allocation4 [shape = 's32[1]{0}', space=sflag, size = 0x4, scoped, tag = 'scoped memory for tpu_custom_call.1']
    #allocation5 [shape = 'u8[512]{0}', space=vmem, size = 0x400, scoped, tag = 'output window, operand 1, single buffered']
    #allocation6 [shape = 's32[1]{0}', space=sflag, size = 0x4, scoped, tag = 'scoped memory for tpu_custom_call.1']
    %9 = vsyncpa [#allocation4], 0
    %10 = vsyncpa [#allocation6], 0
    // Predicated region
    $region2: #{tpu_custom_call.1} parent=1 // pred_check
      _
    $region3: #{tpu_custom_call.1} parent=1 // pred_check_branch
      %12 = sbr.rel (0) target = $region5
    $region4: #{tpu_custom_call.1} parent=1 // pred_region
      _
    $region5: #{tpu_custom_call.1} parent=1 // pred_fallthru
      _
    %s13 = sld [smem:[#allocation2]]
    %s14 = smul.f32 %s13, 0.0
    %v15 = vstv %s14
    %vm16 = vcmask 64512
    %17 = vst.msk [vmem:[#allocation3] sm:$0xff] %vm16, %v15
    %vm18 = vcmask 57344
    %19 = vst.msk [vmem:[#allocation5] sm:$0x1] %vm18, 1.0
    // Predicated region
    $region6: #{tpu_custom_call.1} parent=1 // pred_check
      _
    $region7: #{tpu_custom_call.1} parent=1 // pred_check_branch
      %21 = sbr.rel (0) target = $region9
    $region8: #{tpu_custom_call.1} parent=1 // pred_region
      %s23 = ssub.s32 128, 128
      %24 = vsyncadd [#allocation4], %s23
      %s26 = sshll.u32 [#allocation3], 4
      %s27 = int_to_ptr.vmem [resolvable:$true] %s26
      %29 = dma.vmem_to_hbm [thread:$0]  %s27, 128, %s1, [#allocation4]
    $region9: #{tpu_custom_call.1} parent=1 // pred_fallthru
      _
    // Predicated region
    $region10: #{tpu_custom_call.1} parent=1 // pred_check
      _
    $region11: #{tpu_custom_call.1} parent=1 // pred_check_branch
      %31 = sbr.rel (0) target = $region13
    $region12: #{tpu_custom_call.1} parent=1 // pred_region
      %s33 = ssub.s32 16, 16
      %34 = vsyncadd [#allocation6], %s33
      %s36 = sshll.u32 [#allocation5], 4
      %s37 = int_to_ptr.vmem [resolvable:$true] %s36
      %39 = dma.vmem_to_hbm [thread:$0]  %s37, 16, %s2, [#allocation6]
    $region13: #{tpu_custom_call.1} parent=1 // pred_fallthru
      _
    // Predicated region
    $region14: #{tpu_custom_call.1} parent=1 // pred_check
      _
    $region15: #{tpu_custom_call.1} parent=1 // pred_check_branch
      %41 = sbr.rel (0) target = $region17
    $region16: #{tpu_custom_call.1} parent=1 // pred_region
      %42 = dma.done [#allocation4], 128
    $region17: #{tpu_custom_call.1} parent=1 // pred_fallthru
      _
    // Predicated region
    $region18: #{tpu_custom_call.1} parent=1 // pred_check
      _
    $region19: #{tpu_custom_call.1} parent=1 // pred_check_branch
      %44 = sbr.rel (0) target = $region21
    $region20: #{tpu_custom_call.1} parent=1 // pred_region
      %45 = dma.done [#allocation6], 16
    $region21: #{tpu_custom_call.1} parent=1 // pred_fallthru
      _
    %46 = vsyncpa [#allocation4], 1
    %47 = vsyncpa [#allocation6], 1

</llo_original>
